<compile_context>
chip_gen: v5e
topology: v5e:2x2
jax: 0.10.0
libtpu: 0.0.40
codegen_flags: <defaults>
</compile_context>

<pallas_src>
import math

import jax
import jax.numpy as jnp
from jax import lax
from jax.experimental import pallas as pl
from jax.experimental.pallas import tpu as pltpu


_LANE = 128
_SUBLANE = 8
_DMA_RING = 8              # in-flight row DMAs for the HBM-gather path
_MAX_ONEHOT_VOCAB = 8192   # above this, one-hot matmul wastes MXU/VMEM


def _round_up(x, m):
    return ((x + m - 1) // m) * m


def _vmem_capacity_bytes():
    """Per-TensorCore VMEM capacity (v5e/v6e: 128 MiB, v7x: 64 MiB)."""
    try:
        return int(pltpu.get_tpu_info().vmem_capacity_bytes)
    except Exception:            # conservative fallback = v7x per-TC VMEM
        return 64 * 1024 * 1024


def _pick_block_tokens(n, requested):
    """Largest multiple-of-8 block <= requested, preferring exact divisors of n
    (no padding => no post-kernel output slice copy)."""
    upper = max((min(requested, n) // _SUBLANE) * _SUBLANE, _SUBLANE)
    for cand in range(upper, 0, -_SUBLANE):
        if n % cand == 0 and (cand >= 128 or cand == n):
            return cand
    return upper                 # pad path


def _make_onehot_kernel(block_tokens, n_token, scale):
    """Gather-as-matmul: out = onehot(ids) @ lut * scale (MXU, dense stores)."""

    def kernel(ids_ref, lut_ref, out_ref):
        # ids_ref : (block_tokens, 1) int32  VMEM
        # lut_ref : (n_token, d_emb) float   VMEM (resident; fetched once)
        # out_ref : (block_tokens, d_emb)    VMEM
        ids = ids_ref[...]                                             # (bt, 1)
        vocab = lax.broadcasted_iota(jnp.int32, (block_tokens, n_token), 1)
        onehot = (vocab == ids).astype(lut_ref.dtype)                  # (bt, n_tok)
        acc = jnp.dot(onehot, lut_ref[...],
                      preferred_element_type=jnp.float32)              # MXU
        out_ref[...] = (acc * scale).astype(out_ref.dtype)             # dense store

    return kernel


def _make_dma_gather_kernel(block_tokens, scale, n_ring):
    """Row-gather straight from HBM: one (1, d_emb) DMA per token, n_ring in
    flight, then a single dense *scale pass over the output block."""

    def kernel(ids_sref, lut_hbm, out_ref, sem):
        base = pl.program_id(0) * block_tokens

        def issue(t):
            tok = ids_sref[base + t]                  # scalar read from SMEM
            pltpu.make_async_copy(
                lut_hbm.at[pl.ds(tok, 1), :],
                out_ref.at[pl.ds(t, 1), :],
                sem.at[t % n_ring],
            ).start()

        def wait_for(t):
            pltpu.make_async_copy(
                lut_hbm.at[pl.ds(0, 1), :],           # shape/size only
                out_ref.at[pl.ds(t, 1), :],
                sem.at[t % n_ring],
            ).wait()

        @pl.loop(0, n_ring)                           # prime the ring
        def _(t):
            issue(t)

        @pl.loop(n_ring, block_tokens)                # steady state
        def _(t):
            wait_for(t - n_ring)
            issue(t)

        @pl.loop(block_tokens - n_ring, block_tokens)  # drain
        def _(t):
            wait_for(t)

        out_ref[...] = out_ref[...] * scale           # fused scale, dense

    return kernel


def embeddings_forward(x_ids, lut, *, block_tokens=256, force_dma_gather=False):
    """Pallas equivalent of: nn.Embedding(n_token, d_emb)(x) * sqrt(d_emb).

    x_ids : (...,) int32 token ids (any leading shape)
    lut   : (n_token, d_emb) float table
    returns x_ids.shape + (d_emb,) in lut.dtype
    """
    n_token, d_emb = lut.shape
    scale = float(math.sqrt(d_emb))                 # Python constant, baked in
    out_dtype = lut.dtype
    itemsize = jnp.dtype(out_dtype).itemsize

    # NOTE: nn.Embedding raises on out-of-range ids; we clamp instead.
    flat_ids = jnp.clip(x_ids.reshape(-1).astype(jnp.int32), 0, n_token - 1)
    n = flat_ids.shape[0]

    bt = _pick_block_tokens(n, block_tokens)
    n_blocks = pl.cdiv(n, bt)
    n_pad = n_blocks * bt
    if n_pad != n:
        flat_ids = jnp.pad(flat_ids, (0, n_pad - n))   # padded rows -> token 0

    # ---- per-TensorCore VMEM budgeting --------------------------------------
    vmem_cap = _vmem_capacity_bytes()
    lut_tile = _round_up(n_token, _SUBLANE) * _round_up(d_emb, _LANE) * itemsize
    out_tile = _round_up(bt, _SUBLANE) * _round_up(d_emb, _LANE) * itemsize
    ids_tile = _round_up(bt, _SUBLANE) * _LANE * 4
    onehot_tile = _round_up(bt, _SUBLANE) * _round_up(n_token, _LANE) * 4
    # 2x: Pallas double-buffers every BlockSpec operand (constant-index LUT too).
    # TODO(synk): pipeline_mode=pl.Buffered(1) on the LUT spec would halve its
    # footprint once single-buffering is universally supported.
    resident_need = (2 * lut_tile + 2 * out_tile + 2 * ids_tile
                     + onehot_tile + (4 << 20))

    use_onehot = (not force_dma_gather
                  and n_token <= _MAX_ONEHOT_VOCAB
                  and resident_need <= vmem_cap - (2 << 20))

    # Memory-bound cost hint for the XLA scheduler.
    out_bytes = n_pad * d_emb * itemsize
    if use_onehot:
        bytes_accessed = n_pad * 4 + n_token * d_emb * itemsize + out_bytes
        flops = 2 * n_pad * n_token * d_emb
    else:
        bytes_accessed = n_pad * 4 + 2 * out_bytes
        flops = n_pad * d_emb
    cost = pl.CostEstimate(flops=int(flops), transcendentals=0,
                           bytes_accessed=int(bytes_accessed))

    if use_onehot:
        vmem_limit = int(min(max(resident_need, 32 << 20), vmem_cap - (2 << 20)))
        out_flat = pl.pallas_call(
            _make_onehot_kernel(bt, n_token, scale),
            out_shape=jax.ShapeDtypeStruct((n_pad, d_emb), out_dtype),
            grid=(n_blocks,),
            in_specs=[
                # block of ids as a (bt, 1) column -> no in-kernel relayout
                pl.BlockSpec((bt, 1), lambda i: (i, 0)),
                # whole table, constant block index => DMA'd from HBM once
                pl.BlockSpec((n_token, d_emb), lambda i: (0, 0)),
            ],
            out_specs=pl.BlockSpec((bt, d_emb), lambda i: (i, 0)),
            compiler_params=pltpu.CompilerParams(
                dimension_semantics=("parallel",),    # independent token blocks
                vmem_limit_bytes=vmem_limit,
            ),
            cost_estimate=cost,
        )(flat_ids.reshape(n_pad, 1), lut)
    else:
        # Large-vocab path: table stays in HBM, rows are DMA-gathered per token.
        # TODO(synk): chunk the pallas_call over ~64K-token slices so the
        # scalar-prefetched id vector cannot overflow SMEM at huge B*S.
        n_ring = min(_DMA_RING, bt)
        vmem_limit = int(min(max(2 * out_tile + (4 << 20), 32 << 20),
                             vmem_cap - (2 << 20)))
        out_flat = pl.pallas_call(
            _make_dma_gather_kernel(bt, scale, n_ring),
            out_shape=jax.ShapeDtypeStruct((n_pad, d_emb), out_dtype),
            grid_spec=pltpu.PrefetchScalarGridSpec(
                num_scalar_prefetch=1,                # flat_ids -> SMEM
                grid=(n_blocks,),
                in_specs=[pl.BlockSpec(memory_space=pl.ANY)],   # lut stays in HBM
                out_specs=pl.BlockSpec((bt, d_emb), lambda i, ids: (i, 0)),
                scratch_shapes=[pltpu.SemaphoreType.DMA((n_ring,))],
            ),
            compiler_params=pltpu.CompilerParams(
                dimension_semantics=("arbitrary",),
                vmem_limit_bytes=vmem_limit,
            ),
            cost_estimate=cost,
        )(flat_ids, lut)

    if n_pad != n:
        out_flat = out_flat[:n]
    return out_flat.reshape(*x_ids.shape, d_emb)


if __name__ == "__main__":
    # Module hyper-params (small, consistent with the forward semantics).
    n_token, d_emb = 64, 32
    batch, seq = 2, 8

    key = jax.random.PRNGKey(0)
    k_lut, k_ids = jax.random.split(key)

    # nn.Embedding default init: N(0, 1).
    lut = jax.random.normal(k_lut, (n_token, d_emb), dtype=jnp.float32)
    x_ids = jax.random.randint(k_ids, (batch, seq), 0, n_token, dtype=jnp.int32)

    ref = jnp.take(lut, x_ids, axis=0) * jnp.float32(math.sqrt(d_emb))

    # Path A: resident LUT + one-hot MXU gather (default for this vocab size).
    out = jax.block_until_ready(embeddings_forward(x_ids, lut))
    assert out.shape == (batch, seq, d_emb)
    # tolerance admits a worst-case bf16 MXU pass for the f32 one-hot matmul
    assert jnp.allclose(out, ref, rtol=5e-3, atol=1e-3), "one-hot path mismatch"

    # Path B: HBM DMA row-gather (large-vocab fallback), forced here to
    # exercise it at small shapes; it copies rows bit-exactly.
    out_dma = jax.block_until_ready(
        embeddings_forward(x_ids, lut, force_dma_gather=True))
    assert jnp.allclose(out_dma, ref, rtol=1e-6, atol=1e-6), "dma path mismatch"

    print("KERNEL_OK")
</pallas_src>

<mosaic_0001>
module attributes {stable_mosaic.version = 11 : i64} {
  func.func @kernel(%arg0: i32, %arg1: memref<16x1xi32, #tpu.memory_space<vmem>>, %arg2: memref<64x32xf32, #tpu.memory_space<vmem>>, %arg3: memref<16x32xf32, #tpu.memory_space<vmem>>) attributes {dimension_semantics = [#tpu.dimension_semantics<parallel>], iteration_bounds = array<i64: 1>, scalar_prefetch = 0 : i64, scratch_operands = 0 : i64, tpu.core_type = #tpu.core_type<tc>, window_params = [{transform_indices = @transform_0, window_bounds = array<i64: 16, 1>}, {pipeline_mode = #tpu.pipeline_mode<synchronous>, transform_indices = @transform_1, window_bounds = array<i64: 64, 32>}, {transform_indices = @transform_2, window_bounds = array<i64: 16, 32>}]} {
    %c0 = arith.constant 0 : index
    %c0_0 = arith.constant 0 : index
    %0 = vector.load %arg1[%c0, %c0_0] : memref<16x1xi32, #tpu.memory_space<vmem>>, vector<16x1xi32>
    %1 = tpu.iota {dimensions = array<i32: 1>} : vector<16x64xi32>
    %2 = vector.broadcast %0 : vector<16x1xi32> to vector<16x64xi32>
    %3 = arith.cmpi eq, %1, %2 : vector<16x64xi32>
    %4 = arith.extui %3 : vector<16x64xi1> to vector<16x64xi32>
    %5 = arith.sitofp %4 : vector<16x64xi32> to vector<16x64xf32>
    %c0_1 = arith.constant 0 : index
    %c0_2 = arith.constant 0 : index
    %6 = vector.load %arg2[%c0_1, %c0_2] : memref<64x32xf32, #tpu.memory_space<vmem>>, vector<64x32xf32>
    %cst = arith.constant dense<0.000000e+00> : vector<16x32xf32>
    %7 = tpu.matmul %5, %6, %cst {dimension_numbers = #tpu.dot_dimension_numbers<[1], [0], [0], [1], [0, 0, 1, 1], [], []>} : vector<16x64xf32>, vector<64x32xf32>, vector<16x32xf32> -> vector<16x32xf32>
    %cst_3 = arith.constant 5.65685415 : f32
    %8 = vector.broadcast %cst_3 : f32 to vector<16x32xf32>
    %9 = arith.mulf %7, %8 : vector<16x32xf32>
    %c0_4 = arith.constant 0 : index
    %c0_5 = arith.constant 0 : index
    %10 = vector.load %arg3[%c0_4, %c0_5] : memref<16x32xf32, #tpu.memory_space<vmem>>, vector<16x32xf32>
    tpu.vector_store %arg3[%c0_4, %c0_5], %9 {strides = array<i32>} : memref<16x32xf32, #tpu.memory_space<vmem>>, vector<16x32xf32>,
    return
  }
  func.func @transform_0(%arg0: i32) -> (i32, i32) {
    %c0_i32 = arith.constant 0 : i32
    %c0_i32_0 = arith.constant 0 : i32
    return %arg0, %c0_i32 : i32, i32
  }
  func.func @transform_1(%arg0: i32) -> (i32, i32) {
    %c0_i32 = arith.constant 0 : i32
    %c0_i32_0 = arith.constant 0 : i32
    %c0_i32_1 = arith.constant 0 : i32
    return %c0_i32, %c0_i32_0 : i32, i32
  }
  func.func @transform_2(%arg0: i32) -> (i32, i32) {
    %c0_i32 = arith.constant 0 : i32
    %c0_i32_0 = arith.constant 0 : i32
    return %arg0, %c0_i32 : i32, i32
  }
}

</mosaic_0001>

<llo_original>
// kernel: tpu_custom_call.1
$region0: #{tpu_custom_call.1}
  #allocation0 [shape = 'u32[]', space=smem, size = 0x4, offset = 0x4, fixed_abs, tag = 'smem constant byte address 0x4 - core index']
  #allocation1 [shape = 'u32[72,128]{1,0:T(1,128)}', space=vmem, size = 0x9000, scoped, tag = 'internal scratch']
  %s0 = inlined_call_operand.vmem [shape: s32[16,1], index: 0, kind: input, shape index: {}]
  %s1 = inlined_call_operand.vmem [shape: f32[64,32], index: 1, kind: input, shape index: {}]
  %s2 = inlined_call_operand.hbm [shape: f32[16,32], index: 2, kind: output, shape index: {}]
  %s3 = sld [smem:[#allocation0]]
  $region18: #{tpu_custom_call.1} parent=0
    _
  %s5 = ssub.s32 1, %s3
  %s6 = scalar_select 0, %s5, %s3
  $region1: #{tpu_custom_call.1} parent=0
    #allocation2 [shape = 'u8[8192]{0}', space=vmem, size = 0x2000, scoped, tag = 'output window, operand 0, single buffered']
    #allocation3 [shape = 's32[1]{0}', space=sflag, size = 0x4, scoped, tag = 'scoped memory for tpu_custom_call.1']
    %7 = vsyncpa [#allocation3], 0
    // Predicated region
    $region2: #{tpu_custom_call.1} parent=1 // pred_check
      _
    $region3: #{tpu_custom_call.1} parent=1 // pred_check_branch
      %9 = sbr.rel (0) target = $region5
    $region4: #{tpu_custom_call.1} parent=1 // pred_region
      _
    $region5: #{tpu_custom_call.1} parent=1 // pred_fallthru
      _
    // Predicated region
    $region6: #{tpu_custom_call.1} parent=1 // pred_check
      _
    $region7: #{tpu_custom_call.1} parent=1 // pred_check_branch
      %11 = sbr.rel (0) target = $region9
    $region8: #{tpu_custom_call.1} parent=1 // pred_region
      _
    $region9: #{tpu_custom_call.1} parent=1 // pred_fallthru
      _
    %v12 = vld [vmem:[%s0] sm:$0xff]
    %v13 = vld [vmem:[%s0 + $0x8] sm:$0xff]
    %v14 = vlaneseq
    %v15 = vand.u32 %v14, 127
    %16 = vset.pattern.permute.xlu0 0
    %17 = vperm.xlu0 %16, %v12
    %v18 = vpop.permute.xlu0 %17
    %19 = vset.pattern.permute.xlu0 0
    %20 = vperm.xlu0 %19, %v13
    %v21 = vpop.permute.xlu0 %20
    %vm22 = vcmp.eq.s32.totalorder %v15, %v18
    %vm23 = vcmp.eq.s32.totalorder %v15, %v21
    %v24 = vsel %vm22, 1, 0
    %v25 = vsel %vm23, 1, 0
    %v26 = vcvt.s32.f32 %v24
    %v27 = vcvt.s32.f32 %v25
    %v28 = vld [vmem:[%s1] sm:$0xff]
    %v29 = vld [vmem:[%s1 + $0x8] sm:$0xff]
    %v30 = vld [vmem:[%s1 + $0x10] sm:$0xff]
    %v31 = vld [vmem:[%s1 + $0x18] sm:$0xff]
    %v32 = vld [vmem:[%s1 + $0x20] sm:$0xff]
    %v33 = vld [vmem:[%s1 + $0x28] sm:$0xff]
    %v34 = vld [vmem:[%s1 + $0x30] sm:$0xff]
    %v35 = vld [vmem:[%s1 + $0x38] sm:$0xff]
    %vm36 = vcmask 523264
    %v38 = vsel %vm36, %v26, 0
    %v41 = vsel %vm36, %v27, 0
    %43 = vmatpush.msra.mxu0 0.0
    %44 = vmatpush.msra.mxu0 0.0
    %45 = vmatpush.msra.mxu0 0.0
    %46 = vmatpush.msra.mxu0 0.0
    %47 = vmatpush.msra.mxu0 0.0
    %48 = vmatpush.msra.mxu0 0.0
    %49 = vmatpush.msra.mxu0 0.0
    %50 = vmatpush.msra.mxu0 0.0
    %51 = vmatpush.msra.mxu0 %v35
    %52 = vmatpush.msra.mxu0 %v34
    %53 = vmatpush.msra.mxu0 %v33
    %54 = vmatpush.msra.mxu0 %v32
    %55 = vmatpush.msra.mxu0 %v31
    %56 = vmatpush.msra.mxu0 %v30
    %57 = vmatpush.msra.mxu0 %v29
    %58 = vmatpush.msra.mxu0 %v28
    %59 = vmatmul.f32.gmra.mxu0 %v38
    %v60 = vpop.f32.mrf.mxu0
    %v61 = vadd.f32 0.0, %v60
    %62 = vmatmul.f32.gmra.mxu0 %v41
    %v63 = vpop.f32.mrf.mxu0
    %v64 = vadd.f32 0.0, %v63
    %65 = vdwg.mxu0
    %v66 = vmul.f32 %v61, 5.656854
    %v67 = vmul.f32 %v64, 5.656854
    %vm68 = vcmask 261120
    %69 = vst.msk [vmem:[#allocation2] sm:$0xff] %vm68, %v66
    %70 = vst.msk [vmem:[#allocation2 + $0x8] sm:$0xff] %vm68, %v67
    // Predicated region
    $region10: #{tpu_custom_call.1} parent=1 // pred_check
      _
    $region11: #{tpu_custom_call.1} parent=1 // pred_check_branch
      %72 = sbr.rel (0) target = $region13
    $region12: #{tpu_custom_call.1} parent=1 // pred_region
      %74 = vsyncadd [#allocation3], 0
      %s75 = sshll.u32 [#allocation2], 4
      %s76 = int_to_ptr.vmem [resolvable:$true] %s75
      %s77 = sshll.u32 %s2, 4
      %s78 = int_to_ptr.hbm [resolvable:$true] %s77
      %83 = dma.vmem_to_hbm [thread:$0]  %s76, 256, %s78, [#allocation3], 128, 128, 8
    $region13: #{tpu_custom_call.1} parent=1 // pred_fallthru
      _
    // Predicated region
    $region14: #{tpu_custom_call.1} parent=1 // pred_check
      _
    $region15: #{tpu_custom_call.1} parent=1 // pred_check_branch
      %85 = sbr.rel (0) target = $region17
    $region16: #{tpu_custom_call.1} parent=1 // pred_region
      %87 = dma.done [#allocation3], 256
    $region17: #{tpu_custom_call.1} parent=1 // pred_fallthru
      _
    %88 = vsyncpa [#allocation3], 1

</llo_original>
